<compile_context>
chip_gen: v5e
topology: v5e:2x2
jax: 0.10.0
libtpu: 0.0.40
codegen_flags: <defaults>
</compile_context>

<pallas_src>
import functools
import math

import jax
import jax.numpy as jnp
from jax.experimental import pallas as pl
from jax.experimental.pallas import tpu as pltpu


def _round_up(x: int, m: int) -> int:
    return (x + m - 1) // m * m


def _mlp_kernel(x_ref, w1_ref, b1_ref, w2_ref, b2_ref, w3_ref, b3_ref, o_ref):
    """One batch tile of the fused 3-layer MLP.

    x_ref  : (TILE_B, latent)  f32 (or bf16)   -- cast to bf16 here, not in the wrapper
    w*_ref : (in, out)         bf16, resident across the whole grid
    b*_ref : (1, out)          f32,  resident across the whole grid
    o_ref  : (TILE_B, n_class) f32
    """
    x = x_ref[...].astype(jnp.bfloat16)  # in-kernel cast; no extra HBM pass over x

    # MXU matmuls (bf16 operands, f32 accumulation); bias-add / ReLU in f32 on the VPU.
    h1 = jnp.dot(x, w1_ref[...], preferred_element_type=jnp.float32) + b1_ref[...]
    h1 = jnp.maximum(h1, 0.0).astype(jnp.bfloat16)
    h2 = jnp.dot(h1, w2_ref[...], preferred_element_type=jnp.float32) + b2_ref[...]
    h2 = jnp.maximum(h2, 0.0).astype(jnp.bfloat16)
    o = jnp.dot(h2, w3_ref[...], preferred_element_type=jnp.float32) + b3_ref[...]
    o_ref[...] = o.astype(o_ref.dtype)


@functools.partial(jax.jit, static_argnames=("tile_b",))
def regression_forward(x, params, tile_b=None):
    """Fused forward pass of the 3-layer MLP as one pallas_call over a ragged batch grid."""
    w1, b1, w2, b2, w3, b3 = params
    B, latent = x.shape
    d1, d2, nc = w1.shape[1], w2.shape[1], w3.shape[1]
    assert w1.shape[0] == latent and w2.shape[0] == d1 and w3.shape[0] == d2

    # ---- batch tile size: big (cap 4096) to amortize per-step grid overhead,
    #      multiple of 8, never larger than the batch, and >=2 grid steps when
    #      possible so v7x's two TensorCores both get work.
    if tile_b is None:
        tile_b = 4096
    tile_b = max(8, _round_up(int(tile_b), 8))
    tile_b = min(tile_b, _round_up(B, 8))
    if B > 8 and pl.cdiv(B, tile_b) < 2:
        tile_b = max(8, _round_up(pl.cdiv(B, 2), 8))
    num_tiles = pl.cdiv(B, tile_b)

    # ---- weights cast to bf16 once (tiny, resident across the grid); biases stay f32.
    w1b = w1.astype(jnp.bfloat16)
    w2b = w2.astype(jnp.bfloat16)
    w3b = w3.astype(jnp.bfloat16)

    def resident(shape):
        return pl.BlockSpec(shape, lambda i: (0, 0))

    out = pl.pallas_call(
        _mlp_kernel,
        out_shape=jax.ShapeDtypeStruct((B, nc), jnp.float32),
        grid=(num_tiles,),
        in_specs=[
            pl.BlockSpec((tile_b, latent), lambda i: (i, 0)),  # batch-tiled x
            resident((latent, d1)), resident((1, d1)),          # layer 1
            resident((d1, d2)),     resident((1, d2)),          # layer 2
            resident((d2, nc)),     resident((1, nc)),          # layer 3
        ],
        out_specs=pl.BlockSpec((tile_b, nc), lambda i: (i, 0)),
        compiler_params=pltpu.CompilerParams(
            dimension_semantics=("parallel",),   # v7x: shard batch grid over 2 TCs
            vmem_limit_bytes=32 * 1024 * 1024,
        ),
    )(x, w1b, b1, w2b, b2, w3b, b3)

    return out


def init_regression_params(key, n_class, latent_dim, class_dim):
    """Deterministic init mimicking torch.nn.Linear default (U[-1/sqrt(fan_in), +1/sqrt(fan_in)]).
    Weights stored as (in_features, out_features) so y = x @ W + b matches PyTorch's
    y = x @ W_pt.T + b; biases stored as (1, out_features)."""
    dims = [latent_dim, class_dim[0], class_dim[1], n_class]
    params = []
    for i in range(3):
        fan_in, fan_out = dims[i], dims[i + 1]
        key, kw, kb = jax.random.split(key, 3)
        bound = 1.0 / math.sqrt(fan_in)
        w = jax.random.uniform(kw, (fan_in, fan_out), jnp.float32, -bound, bound)
        b = jax.random.uniform(kb, (1, fan_out), jnp.float32, -bound, bound)
        params += [w, b]
    return tuple(params)


def _reference_forward(x, params):
    """JAX reference with the same bf16-operand / f32-accumulate math as the kernel."""
    w1, b1, w2, b2, w3, b3 = params
    bf = jnp.bfloat16
    h1 = jnp.dot(x.astype(bf), w1.astype(bf), preferred_element_type=jnp.float32) + b1
    h1 = jnp.maximum(h1, 0.0)
    h2 = jnp.dot(h1.astype(bf), w2.astype(bf), preferred_element_type=jnp.float32) + b2
    h2 = jnp.maximum(h2, 0.0)
    return jnp.dot(h2.astype(bf), w3.astype(bf), preferred_element_type=jnp.float32) + b3


if __name__ == "__main__":
    # Small shapes consistent with the module's forward: x is (batch, latent_dim).
    latent_dim = 32
    class_dim = [64, 32]
    n_class = 16

    key = jax.random.PRNGKey(0)
    key, kx1, kx2 = jax.random.split(key, 3)
    params = init_regression_params(key, n_class, latent_dim, class_dim)

    # Case 1: tiny batch -> single grid step, tile clamped to the batch.
    x1 = jax.random.normal(kx1, (8, latent_dim), jnp.float32)
    out1 = jax.block_until_ready(regression_forward(x1, params))
    ref1 = _reference_forward(x1, params)
    assert out1.shape == (8, n_class)
    assert jnp.allclose(out1, ref1, atol=1e-3, rtol=1e-3), "case1 mismatch vs JAX reference"

    # Case 2: batch not divisible by the tile -> exercises the ragged last block
    # (masked OOB stores) and a multi-step grid.
    x2 = jax.random.normal(kx2, (50, latent_dim), jnp.float32)
    out2 = jax.block_until_ready(regression_forward(x2, params, tile_b=16))
    ref2 = _reference_forward(x2, params)
    assert out2.shape == (50, n_class)
    assert jnp.allclose(out2, ref2, atol=1e-3, rtol=1e-3), "case2 mismatch vs JAX reference"

    # Case 3: default (auto) tile selection with >=2-tile guarantee + ragged tail.
    x3 = jax.random.normal(kx2, (50, latent_dim), jnp.float32)
    out3 = jax.block_until_ready(regression_forward(x3, params))
    ref3 = _reference_forward(x3, params)
    assert out3.shape == (50, n_class)
    assert jnp.allclose(out3, ref3, atol=1e-3, rtol=1e-3), "case3 mismatch vs JAX reference"

    print("KERNEL_OK")
</pallas_src>

<mosaic_0001>
module attributes {stable_mosaic.version = 11 : i64} {
  func.func @_mlp_kernel(%arg0: i32, %arg1: memref<8x32xf32, #tpu.memory_space<vmem>>, %arg2: memref<32x64xbf16, #tpu.memory_space<vmem>>, %arg3: memref<1x64xf32, #tpu.memory_space<vmem>>, %arg4: memref<64x32xbf16, #tpu.memory_space<vmem>>, %arg5: memref<1x32xf32, #tpu.memory_space<vmem>>, %arg6: memref<32x16xbf16, #tpu.memory_space<vmem>>, %arg7: memref<1x16xf32, #tpu.memory_space<vmem>>, %arg8: memref<8x16xf32, #tpu.memory_space<vmem>>) attributes {dimension_semantics = [#tpu.dimension_semantics<parallel>], iteration_bounds = array<i64: 1>, scalar_prefetch = 0 : i64, scratch_operands = 0 : i64, tpu.core_type = #tpu.core_type<tc>, window_params = [{transform_indices = @transform_0, window_bounds = array<i64: 8, 32>}, {pipeline_mode = #tpu.pipeline_mode<synchronous>, transform_indices = @transform_1, window_bounds = array<i64: 32, 64>}, {pipeline_mode = #tpu.pipeline_mode<synchronous>, transform_indices = @transform_2, window_bounds = array<i64: 1, 64>}, {pipeline_mode = #tpu.pipeline_mode<synchronous>, transform_indices = @transform_3, window_bounds = array<i64: 64, 32>}, {pipeline_mode = #tpu.pipeline_mode<synchronous>, transform_indices = @transform_4, window_bounds = array<i64: 1, 32>}, {pipeline_mode = #tpu.pipeline_mode<synchronous>, transform_indices = @transform_5, window_bounds = array<i64: 32, 16>}, {pipeline_mode = #tpu.pipeline_mode<synchronous>, transform_indices = @transform_6, window_bounds = array<i64: 1, 16>}, {transform_indices = @transform_7, window_bounds = array<i64: 8, 16>}]} {
    %c0 = arith.constant 0 : index
    %c0_0 = arith.constant 0 : index
    %0 = vector.load %arg1[%c0, %c0_0] : memref<8x32xf32, #tpu.memory_space<vmem>>, vector<8x32xf32>
    %1 = arith.truncf %0 : vector<8x32xf32> to vector<8x32xbf16>
    %c0_1 = arith.constant 0 : index
    %c0_2 = arith.constant 0 : index
    %2 = vector.load %arg2[%c0_1, %c0_2] : memref<32x64xbf16, #tpu.memory_space<vmem>>, vector<32x64xbf16>
    %cst = arith.constant dense<0.000000e+00> : vector<8x64xf32>
    %3 = tpu.matmul %1, %2, %cst {dimension_numbers = #tpu.dot_dimension_numbers<[1], [0], [0], [1], [0, 0, 1, 1], [], []>} : vector<8x32xbf16>, vector<32x64xbf16>, vector<8x64xf32> -> vector<8x64xf32>
    %c0_3 = arith.constant 0 : index
    %c0_4 = arith.constant 0 : index
    %4 = vector.load %arg3[%c0_3, %c0_4] : memref<1x64xf32, #tpu.memory_space<vmem>>, vector<1x64xf32>
    %5 = vector.broadcast %4 : vector<1x64xf32> to vector<8x64xf32>
    %6 = arith.addf %3, %5 : vector<8x64xf32>
    %cst_5 = arith.constant 0.000000e+00 : f32
    %7 = vector.broadcast %cst_5 : f32 to vector<8x64xf32>
    %8 = arith.maximumf %6, %7 : vector<8x64xf32>
    %9 = arith.truncf %8 : vector<8x64xf32> to vector<8x64xbf16>
    %c0_6 = arith.constant 0 : index
    %c0_7 = arith.constant 0 : index
    %10 = vector.load %arg4[%c0_6, %c0_7] : memref<64x32xbf16, #tpu.memory_space<vmem>>, vector<64x32xbf16>
    %cst_8 = arith.constant dense<0.000000e+00> : vector<8x32xf32>
    %11 = tpu.matmul %9, %10, %cst_8 {dimension_numbers = #tpu.dot_dimension_numbers<[1], [0], [0], [1], [0, 0, 1, 1], [], []>} : vector<8x64xbf16>, vector<64x32xbf16>, vector<8x32xf32> -> vector<8x32xf32>
    %c0_9 = arith.constant 0 : index
    %c0_10 = arith.constant 0 : index
    %12 = vector.load %arg5[%c0_9, %c0_10] : memref<1x32xf32, #tpu.memory_space<vmem>>, vector<1x32xf32>
    %13 = vector.broadcast %12 : vector<1x32xf32> to vector<8x32xf32>
    %14 = arith.addf %11, %13 : vector<8x32xf32>
    %cst_11 = arith.constant 0.000000e+00 : f32
    %15 = vector.broadcast %cst_11 : f32 to vector<8x32xf32>
    %16 = arith.maximumf %14, %15 : vector<8x32xf32>
    %17 = arith.truncf %16 : vector<8x32xf32> to vector<8x32xbf16>
    %c0_12 = arith.constant 0 : index
    %c0_13 = arith.constant 0 : index
    %18 = vector.load %arg6[%c0_12, %c0_13] : memref<32x16xbf16, #tpu.memory_space<vmem>>, vector<32x16xbf16>
    %cst_14 = arith.constant dense<0.000000e+00> : vector<8x16xf32>
    %19 = tpu.matmul %17, %18, %cst_14 {dimension_numbers = #tpu.dot_dimension_numbers<[1], [0], [0], [1], [0, 0, 1, 1], [], []>} : vector<8x32xbf16>, vector<32x16xbf16>, vector<8x16xf32> -> vector<8x16xf32>
    %c0_15 = arith.constant 0 : index
    %c0_16 = arith.constant 0 : index
    %20 = vector.load %arg7[%c0_15, %c0_16] : memref<1x16xf32, #tpu.memory_space<vmem>>, vector<1x16xf32>
    %21 = vector.broadcast %20 : vector<1x16xf32> to vector<8x16xf32>
    %22 = arith.addf %19, %21 : vector<8x16xf32>
    %c0_17 = arith.constant 0 : index
    %c0_18 = arith.constant 0 : index
    %23 = vector.load %arg8[%c0_17, %c0_18] : memref<8x16xf32, #tpu.memory_space<vmem>>, vector<8x16xf32>
    tpu.vector_store %arg8[%c0_17, %c0_18], %22 {strides = array<i32>} : memref<8x16xf32, #tpu.memory_space<vmem>>, vector<8x16xf32>,
    return
  }
  func.func @transform_0(%arg0: i32) -> (i32, i32) {
    %c0_i32 = arith.constant 0 : i32
    %c0_i32_0 = arith.constant 0 : i32
    return %arg0, %c0_i32 : i32, i32
  }
  func.func @transform_1(%arg0: i32) -> (i32, i32) {
    %c0_i32 = arith.constant 0 : i32
    %c0_i32_0 = arith.constant 0 : i32
    %c0_i32_1 = arith.constant 0 : i32
    return %c0_i32, %c0_i32_0 : i32, i32
  }
  func.func @transform_2(%arg0: i32) -> (i32, i32) {
    %c0_i32 = arith.constant 0 : i32
    %c0_i32_0 = arith.constant 0 : i32
    %c0_i32_1 = arith.constant 0 : i32
    return %c0_i32, %c0_i32_0 : i32, i32
  }
  func.func @transform_3(%arg0: i32) -> (i32, i32) {
    %c0_i32 = arith.constant 0 : i32
    %c0_i32_0 = arith.constant 0 : i32
    %c0_i32_1 = arith.constant 0 : i32
    return %c0_i32, %c0_i32_0 : i32, i32
  }
  func.func @transform_4(%arg0: i32) -> (i32, i32) {
    %c0_i32 = arith.constant 0 : i32
    %c0_i32_0 = arith.constant 0 : i32
    %c0_i32_1 = arith.constant 0 : i32
    return %c0_i32, %c0_i32_0 : i32, i32
  }
  func.func @transform_5(%arg0: i32) -> (i32, i32) {
    %c0_i32 = arith.constant 0 : i32
    %c0_i32_0 = arith.constant 0 : i32
    %c0_i32_1 = arith.constant 0 : i32
    return %c0_i32, %c0_i32_0 : i32, i32
  }
  func.func @transform_6(%arg0: i32) -> (i32, i32) {
    %c0_i32 = arith.constant 0 : i32
    %c0_i32_0 = arith.constant 0 : i32
    %c0_i32_1 = arith.constant 0 : i32
    return %c0_i32, %c0_i32_0 : i32, i32
  }
  func.func @transform_7(%arg0: i32) -> (i32, i32) {
    %c0_i32 = arith.constant 0 : i32
    %c0_i32_0 = arith.constant 0 : i32
    return %arg0, %c0_i32 : i32, i32
  }
}

</mosaic_0001>

<llo_original>
// kernel: regression_forward.1
$region0: #{regression_forward.1}
  #allocation0 [shape = 'u32[]', space=smem, size = 0x4, offset = 0x4, fixed_abs, tag = 'smem constant byte address 0x4 - core index']
  #allocation1 [shape = 'u32[72,128]{1,0:T(1,128)}', space=vmem, size = 0x9000, scoped, tag = 'internal scratch']
  %s0 = inlined_call_operand.vmem [shape: f32[8,32], index: 0, kind: input, shape index: {}]
  %s1 = inlined_call_operand.vmem [shape: bf16[32,64], index: 1, kind: input, shape index: {}]
  %s2 = inlined_call_operand.vmem [shape: f32[1,64], index: 2, kind: input, shape index: {}]
  %s3 = inlined_call_operand.vmem [shape: bf16[64,32], index: 3, kind: input, shape index: {}]
  %s4 = inlined_call_operand.vmem [shape: f32[1,32], index: 4, kind: input, shape index: {}]
  %s5 = inlined_call_operand.vmem [shape: bf16[32,16], index: 5, kind: input, shape index: {}]
  %s6 = inlined_call_operand.vmem [shape: f32[1,16], index: 6, kind: input, shape index: {}]
  %s7 = inlined_call_operand.hbm [shape: f32[8,16], index: 7, kind: output, shape index: {}]
  %s8 = sld [smem:[#allocation0]]
  $region38: #{regression_forward.1} parent=0
    _
  %s10 = ssub.s32 1, %s8
  %s11 = scalar_select 0, %s10, %s8
  $region1: #{regression_forward.1} parent=0
    #allocation2 [shape = 'u8[4096]{0}', space=vmem, size = 0x1000, scoped, tag = 'output window, operand 0, single buffered']
    #allocation3 [shape = 's32[1]{0}', space=sflag, size = 0x4, scoped, tag = 'scoped memory for regression_forward.1']
    %12 = vsyncpa [#allocation3], 0
    // Predicated region
    $region2: #{regression_forward.1} parent=1 // pred_check
      _
    $region3: #{regression_forward.1} parent=1 // pred_check_branch
      %14 = sbr.rel (0) target = $region5
    $region4: #{regression_forward.1} parent=1 // pred_region
      _
    $region5: #{regression_forward.1} parent=1 // pred_fallthru
      _
    // Predicated region
    $region6: #{regression_forward.1} parent=1 // pred_check
      _
    $region7: #{regression_forward.1} parent=1 // pred_check_branch
      %16 = sbr.rel (0) target = $region9
    $region8: #{regression_forward.1} parent=1 // pred_region
      _
    $region9: #{regression_forward.1} parent=1 // pred_fallthru
      _
    // Predicated region
    $region10: #{regression_forward.1} parent=1 // pred_check
      _
    $region11: #{regression_forward.1} parent=1 // pred_check_branch
      %18 = sbr.rel (0) target = $region13
    $region12: #{regression_forward.1} parent=1 // pred_region
      _
    $region13: #{regression_forward.1} parent=1 // pred_fallthru
      _
    // Predicated region
    $region14: #{regression_forward.1} parent=1 // pred_check
      _
    $region15: #{regression_forward.1} parent=1 // pred_check_branch
      %20 = sbr.rel (0) target = $region17
    $region16: #{regression_forward.1} parent=1 // pred_region
      _
    $region17: #{regression_forward.1} parent=1 // pred_fallthru
      _
    // Predicated region
    $region18: #{regression_forward.1} parent=1 // pred_check
      _
    $region19: #{regression_forward.1} parent=1 // pred_check_branch
      %22 = sbr.rel (0) target = $region21
    $region20: #{regression_forward.1} parent=1 // pred_region
      _
    $region21: #{regression_forward.1} parent=1 // pred_fallthru
      _
    // Predicated region
    $region22: #{regression_forward.1} parent=1 // pred_check
      _
    $region23: #{regression_forward.1} parent=1 // pred_check_branch
      %24 = sbr.rel (0) target = $region25
    $region24: #{regression_forward.1} parent=1 // pred_region
      _
    $region25: #{regression_forward.1} parent=1 // pred_fallthru
      _
    // Predicated region
    $region26: #{regression_forward.1} parent=1 // pred_check
      _
    $region27: #{regression_forward.1} parent=1 // pred_check_branch
      %26 = sbr.rel (0) target = $region29
    $region28: #{regression_forward.1} parent=1 // pred_region
      _
    $region29: #{regression_forward.1} parent=1 // pred_fallthru
      _
    %v28 = vld [vmem:[%s0] sm:$0xff]
    %v29 = vpack.c.bf16 %v28, %v28
    %v30 = vld [vmem:[%s1] sm:$0xf]
    %v31 = vld [vmem:[%s1 + $0x4] sm:$0xf]
    %v32 = vld [vmem:[%s1 + $0x8] sm:$0xf]
    %v33 = vld [vmem:[%s1 + $0xc] sm:$0xf]
    %v34 = vld [vmem:[%s2] sm:$0x1]
    %v36 = vperm.slane %v34, 0
    %v42 = vunpack.c.l.b16 %v30
    %v43 = vunpack.c.l.b16 %v31
    %v44 = vunpack.c.l.b16 %v32
    %v45 = vunpack.c.l.b16 %v33
    %v46 = vpack.c.b16 %v43, %v42
    %v47 = vpack.c.b16 %v45, %v44
    %vm50 = vcmask 261120
    %v52 = vsel %vm50, %v29, 0
    %54 = vmatpush.bf16.msra.mxu0 0
    %55 = vmatpush.bf16.msra.mxu0 0
    %56 = vmatpush.bf16.msra.mxu0 0
    %57 = vmatpush.bf16.msra.mxu0 0
    %58 = vmatpush.bf16.msra.mxu0 0
    %59 = vmatpush.bf16.msra.mxu0 0
    %60 = vmatpush.bf16.msra.mxu0 %v47
    %61 = vmatpush.bf16.msra.mxu0 %v46
    %62 = vmatmul.bf16.gmra.mxu0 %v52
    %v63 = vpop.f32.mrf.mxu0
    %v64 = vadd.f32 %v36, %v63
    %v65 = vpop.f32.mrf.mxu0
    %66 = vdwg.mxu0
    %v67 = vmax.f32 %v64, 0.0
    %v68 = vpack.c.bf16 %v67, %v67
    %v69 = vld [vmem:[%s3] sm:$0xf]
    %v70 = vld [vmem:[%s3 + $0x4] sm:$0xf]
    %v71 = vld [vmem:[%s3 + $0x8] sm:$0xf]
    %v72 = vld [vmem:[%s3 + $0xc] sm:$0xf]
    %v73 = vld [vmem:[%s3 + $0x10] sm:$0xf]
    %v74 = vld [vmem:[%s3 + $0x14] sm:$0xf]
    %v75 = vld [vmem:[%s3 + $0x18] sm:$0xf]
    %v76 = vld [vmem:[%s3 + $0x1c] sm:$0xf]
    %v77 = vld [vmem:[%s4] sm:$0x1]
    %v79 = vperm.slane %v77, 0
    %v89 = vunpack.c.l.b16 %v69
    %v90 = vunpack.c.l.b16 %v70
    %v91 = vunpack.c.l.b16 %v71
    %v92 = vunpack.c.l.b16 %v72
    %v93 = vunpack.c.l.b16 %v73
    %v94 = vunpack.c.l.b16 %v74
    %v95 = vunpack.c.l.b16 %v75
    %v96 = vunpack.c.l.b16 %v76
    %v97 = vpack.c.b16 %v90, %v89
    %v98 = vpack.c.b16 %v92, %v91
    %v99 = vpack.c.b16 %v94, %v93
    %v100 = vpack.c.b16 %v96, %v95
    %vm105 = vcmask 523264
    %v107 = vsel %vm105, %v68, 0
    %109 = vmatpush.bf16.msra.mxu0 0
    %110 = vmatpush.bf16.msra.mxu0 0
    %111 = vmatpush.bf16.msra.mxu0 0
    %112 = vmatpush.bf16.msra.mxu0 0
    %113 = vmatpush.bf16.msra.mxu0 %v100
    %114 = vmatpush.bf16.msra.mxu0 %v99
    %115 = vmatpush.bf16.msra.mxu0 %v98
    %116 = vmatpush.bf16.msra.mxu0 %v97
    %117 = vmatmul.bf16.gmra.mxu0 %v107
    %v118 = vpop.f32.mrf.mxu0
    %v119 = vadd.f32 %v79, %v118
    %v120 = vpop.f32.mrf.mxu0
    %121 = vdwg.mxu0
    %v122 = vmax.f32 %v119, 0.0
    %v123 = vpack.c.bf16 %v122, %v122
    %v124 = vld [vmem:[%s5] sm:$0xf]
    %v125 = vld [vmem:[%s5 + $0x4] sm:$0xf]
    %v126 = vld [vmem:[%s5 + $0x8] sm:$0xf]
    %v127 = vld [vmem:[%s5 + $0xc] sm:$0xf]
    %v128 = vld [vmem:[%s6] sm:$0x1]
    %v130 = vperm.slane %v128, 0
    %v136 = vunpack.c.l.b16 %v124
    %v137 = vunpack.c.l.b16 %v125
    %v138 = vunpack.c.l.b16 %v126
    %v139 = vunpack.c.l.b16 %v127
    %v140 = vpack.c.b16 %v137, %v136
    %v141 = vpack.c.b16 %v139, %v138
    %v145 = vsel %vm50, %v123, 0
    %147 = vmatpush.bf16.msra.mxu0 0
    %148 = vmatpush.bf16.msra.mxu0 0
    %149 = vmatpush.bf16.msra.mxu0 0
    %150 = vmatpush.bf16.msra.mxu0 0
    %151 = vmatpush.bf16.msra.mxu0 0
    %152 = vmatpush.bf16.msra.mxu0 0
    %153 = vmatpush.bf16.msra.mxu0 %v141
    %154 = vmatpush.bf16.msra.mxu0 %v140
    %155 = vmatmul.bf16.gmra.mxu0 %v145
    %v156 = vpop.f32.mrf.mxu0
    %v157 = vadd.f32 %v130, %v156
    %v158 = vpop.f32.mrf.mxu0
    %159 = vdwg.mxu0
    %vm160 = vcmask 130048
    %161 = vst.msk [vmem:[#allocation2] sm:$0xff] %vm160, %v157
    // Predicated region
    $region30: #{regression_forward.1} parent=1 // pred_check
      _
    $region31: #{regression_forward.1} parent=1 // pred_check_branch
      %163 = sbr.rel (0) target = $region33
    $region32: #{regression_forward.1} parent=1 // pred_region
      %165 = vsyncadd [#allocation3], 0
      %s167 = sshll.u32 [#allocation2], 4
      %s168 = int_to_ptr.vmem [resolvable:$true] %s167
      %s169 = sshll.u32 %s7, 4
      %s170 = int_to_ptr.hbm [resolvable:$true] %s169
      %172 = dma.vmem_to_hbm [thread:$0]  %s168, 128, %s170, [#allocation3]
    $region33: #{regression_forward.1} parent=1 // pred_fallthru
      _
    // Predicated region
    $region34: #{regression_forward.1} parent=1 // pred_check
      _
    $region35: #{regression_forward.1} parent=1 // pred_check_branch
      %174 = sbr.rel (0) target = $region37
    $region36: #{regression_forward.1} parent=1 // pred_region
      %176 = dma.done [#allocation3], 128
    $region37: #{regression_forward.1} parent=1 // pred_fallthru
      _
    %177 = vsyncpa [#allocation3], 1

</llo_original>
